<compile_context>
chip_gen: v7x
topology: tpu7x:2x2x1
jax: 0.10.0
libtpu: 0.0.40
codegen_flags: <defaults>
</compile_context>

<pallas_src>
import functools

import jax
import jax.numpy as jnp
from jax.experimental import pallas as pl
from jax.experimental.pallas import tpu as pltpu

_SUBLANE = 8  # f32/bf16 sublane granularity; pad batch to a multiple of this.


def _round_up(n, m):
    return ((n + m - 1) // m) * m


def _time_embedding_kernel(x_ref, w1_ref, b1_ref, w2_ref, b2_ref, out_ref, *,
                           f32_compute):
    """One fused block: out = silu(x @ w1 + b1) @ w2 + b2."""
    x = x_ref[...]
    if f32_compute:
        # Small-batch path: weights are stored bf16 (half the HBM DMA) but are
        # upcast in VMEM; x stays f32 -> full f32 matmuls (precision is free,
        # compute is negligible at B <= 8).
        w1 = w1_ref[...].astype(jnp.float32)
        w2 = w2_ref[...].astype(jnp.float32)
        x = x.astype(jnp.float32)
    else:
        # Large-batch path: bf16 operands on the MXU, f32 accumulation.
        w1 = w1_ref[...]
        w2 = w2_ref[...]
        x = x.astype(w1.dtype)

    # ---- linear1 ----
    h = jnp.dot(x, w1, preferred_element_type=jnp.float32)
    h = h + b1_ref[...]                     # (1, H) f32 bias broadcasts over rows
    # ---- SiLU in f32 (sigmoid on the EUP) ----
    h = h * jax.nn.sigmoid(h)
    # ---- linear2 ----
    if not f32_compute:
        h = h.astype(w2.dtype)
    y = jnp.dot(h, w2, preferred_element_type=jnp.float32)
    y = y + b2_ref[...]
    out_ref[...] = y.astype(out_ref.dtype)


def prepare_time_embedding_params(w1, b1, w2, b2, *, compute_dtype=jnp.bfloat16):
    """Cast / reshape parameters ONCE at model-load time (not per forward call).

    w1: [E, 4E], w2: [4E, 4E]  (already transposed from PyTorch's (out, in)),
    b1, b2: [4E].  Returns (w1_c, b1_2d, w2_c, b2_2d) ready for time_embedding().
    """
    E, H = w1.shape
    assert w2.shape == (H, H) and b1.shape == (H,) and b2.shape == (H,)
    w1_c = jnp.asarray(w1, compute_dtype)
    w2_c = jnp.asarray(w2, compute_dtype)
    # Biases stay f32 (added after the f32 accumulation) and are kept 2-D (1, H).
    b1_2d = jnp.asarray(b1, jnp.float32).reshape(1, H)
    b2_2d = jnp.asarray(b2, jnp.float32).reshape(1, H)
    return w1_c, b1_2d, w2_c, b2_2d


def time_embedding(x, params, *, out_dtype=None, batch_tile=128):
    """x: [B, E]; params from prepare_time_embedding_params(); returns [B, 4E]."""
    w1_c, b1_2d, w2_c, b2_2d = params
    B, E = x.shape
    H = w1_c.shape[1]
    assert w1_c.shape == (E, H) and w2_c.shape == (H, H)
    assert b1_2d.shape == (1, H) and b2_2d.shape == (1, H)
    # Lane-dense output (avoids masked partial stores). True for real SD sizes
    # (E=320 -> H=1280) and for this demo (E=32 -> H=128).
    assert H % 128 == 0, "4*embed_dim must be a multiple of 128 (pad weights if not)"

    out_dtype = x.dtype if out_dtype is None else out_dtype

    # Pad batch only to a full sublane (no full-tile padding waste).
    Bp = _round_up(max(B, 1), _SUBLANE)

    param_bytes = int(w1_c.size * w1_c.dtype.itemsize
                      + w2_c.size * w2_c.dtype.itemsize
                      + (b1_2d.size + b2_2d.size) * 4)
    io_bytes = int(Bp * E * x.dtype.itemsize
                   + Bp * H * jnp.dtype(out_dtype).itemsize)
    cost = pl.CostEstimate(
        flops=int(2 * Bp * (E * H + H * H)),
        transcendentals=int(Bp * H),
        bytes_accessed=param_bytes + io_bytes,
    )

    if Bp <= batch_tile:
        # Timestep path (B <= 8 in Stable Diffusion): single whole-array call,
        # no grid / pipeline bookkeeping, f32 compute with bf16-stored weights.
        x_p = jnp.pad(x, ((0, Bp - B), (0, 0))) if Bp != B else x
        kernel = functools.partial(_time_embedding_kernel, f32_compute=True)
        out = pl.pallas_call(
            kernel,
            out_shape=jax.ShapeDtypeStruct((Bp, H), out_dtype),
            cost_estimate=cost,
        )(x_p, w1_c, b1_2d, w2_c, b2_2d)
    else:
        # Large-batch path: 1-D grid over batch tiles.  Weights/biases have
        # constant index_maps (fetched once, VMEM-resident) and are single
        # buffered; x/out tiles are double-buffered by the auto-pipeline.
        tb = batch_tile
        x_p = jnp.pad(x, ((0, Bp - B), (0, 0))) if Bp != B else x
        n_blocks = pl.cdiv(Bp, tb)

        resident = functools.partial(pl.BlockSpec, pipeline_mode=pl.Buffered(1))

        vmem_needed = (param_bytes
                       + 2 * tb * E * x_p.dtype.itemsize              # x tiles (2 bufs)
                       + 2 * tb * H * jnp.dtype(out_dtype).itemsize   # out tiles (2 bufs)
                       + 2 * tb * H * 4)                              # f32 h intermediates
        vmem_limit = min(max(int(1.5 * vmem_needed) + (4 << 20), 32 << 20), 64 << 20)

        kernel = functools.partial(_time_embedding_kernel, f32_compute=False)
        out = pl.pallas_call(
            kernel,
            out_shape=jax.ShapeDtypeStruct((Bp, H), out_dtype),
            grid=(n_blocks,),
            in_specs=[
                pl.BlockSpec((tb, E), lambda i: (i, 0)),
                resident((E, H), lambda i: (0, 0)),
                resident((1, H), lambda i: (0, 0)),
                resident((H, H), lambda i: (0, 0)),
                resident((1, H), lambda i: (0, 0)),
            ],
            out_specs=pl.BlockSpec((tb, H), lambda i: (i, 0)),
            compiler_params=pltpu.CompilerParams(
                dimension_semantics=("parallel",),
                vmem_limit_bytes=vmem_limit,
            ),
            cost_estimate=cost,
        )(x_p, w1_c, b1_2d, w2_c, b2_2d)

    return out[:B] if out.shape[0] != B else out


def reference_time_embedding(x, w1, b1, w2, b2, *, weight_dtype=None):
    """Pure-JAX reference.  If weight_dtype is given, weights are rounded to it
    (mirroring the kernel's bf16 weight storage) but compute stays f32."""
    if weight_dtype is not None:
        w1 = w1.astype(weight_dtype)
        w2 = w2.astype(weight_dtype)
    w1 = w1.astype(jnp.float32)
    w2 = w2.astype(jnp.float32)
    x = x.astype(jnp.float32)
    h = jnp.dot(x, w1, precision=jax.lax.Precision.HIGHEST) + b1.astype(jnp.float32)
    h = h * jax.nn.sigmoid(h)
    y = jnp.dot(h, w2, precision=jax.lax.Precision.HIGHEST) + b2.astype(jnp.float32)
    return y


if __name__ == "__main__":
    E = 32          # embed_dim
    H = 4 * E       # 128

    key = jax.random.PRNGKey(0)
    kx, k1, k2, k3, k4, kx2 = jax.random.split(key, 6)

    # Deterministic synthetic nn.Linear-like parameters, stored as (in, out).
    w1 = jax.random.normal(k1, (E, H), dtype=jnp.float32) * (1.0 / jnp.sqrt(E))
    b1 = jax.random.normal(k2, (H,), dtype=jnp.float32) * 0.01
    w2 = jax.random.normal(k3, (H, H), dtype=jnp.float32) * (1.0 / jnp.sqrt(H))
    b2 = jax.random.normal(k4, (H,), dtype=jnp.float32) * 0.01

    # Hoisted: cast / reshape the parameters ONCE (not inside the forward call).
    params = prepare_time_embedding_params(w1, b1, w2, b2)

    # ---- small-batch (timestep) path: B=2, no grid, f32 compute ----
    B = 2
    x = jax.random.normal(kx, (B, E), dtype=jnp.float32)
    out = jax.block_until_ready(time_embedding(x, params))
    assert out.shape == (B, H), out.shape
    assert out.dtype == x.dtype, out.dtype

    ref_bf16w = reference_time_embedding(x, w1, b1, w2, b2, weight_dtype=jnp.bfloat16)
    assert jnp.allclose(out.astype(jnp.float32), ref_bf16w, atol=2e-2, rtol=2e-2), \
        "small-batch path: mismatch vs bf16-weight reference"
    ref_f32 = reference_time_embedding(x, w1, b1, w2, b2)
    assert jnp.allclose(out.astype(jnp.float32), ref_f32, atol=5e-2, rtol=5e-2), \
        "small-batch path: mismatch vs f32 reference"

    # ---- large-batch path: 1-D grid over batch tiles, bf16 MXU, bf16 output ----
    B2 = 20
    x2 = jax.random.normal(kx2, (B2, E), dtype=jnp.float32)
    out2 = jax.block_until_ready(
        time_embedding(x2, params, out_dtype=jnp.bfloat16, batch_tile=8))
    assert out2.shape == (B2, H), out2.shape
    assert out2.dtype == jnp.bfloat16, out2.dtype

    ref2 = reference_time_embedding(x2, w1, b1, w2, b2)
    assert jnp.allclose(out2.astype(jnp.float32), ref2, atol=1e-1, rtol=1e-1), \
        "large-batch path: mismatch vs f32 reference"

    print("KERNEL_OK")
</pallas_src>

<mosaic_0001>
module attributes {stable_mosaic.version = 11 : i64} {
  func.func @_time_embedding_kernel(%arg0: memref<8x32xf32, #tpu.memory_space<vmem>>, %arg1: memref<32x128xbf16, #tpu.memory_space<vmem>>, %arg2: memref<1x128xf32, #tpu.memory_space<vmem>>, %arg3: memref<128x128xbf16, #tpu.memory_space<vmem>>, %arg4: memref<1x128xf32, #tpu.memory_space<vmem>>, %arg5: memref<8x128xf32, #tpu.memory_space<vmem>>) attributes {dimension_semantics = [], scalar_prefetch = 0 : i64, scratch_operands = 0 : i64, tpu.core_type = #tpu.core_type<tc>} {
    %c0 = arith.constant 0 : index
    %c0_0 = arith.constant 0 : index
    %0 = vector.load %arg0[%c0, %c0_0] : memref<8x32xf32, #tpu.memory_space<vmem>>, vector<8x32xf32>
    %c0_1 = arith.constant 0 : index
    %c0_2 = arith.constant 0 : index
    %1 = vector.load %arg1[%c0_1, %c0_2] : memref<32x128xbf16, #tpu.memory_space<vmem>>, vector<32x128xbf16>
    %2 = arith.extf %1 : vector<32x128xbf16> to vector<32x128xf32>
    %c0_3 = arith.constant 0 : index
    %c0_4 = arith.constant 0 : index
    %3 = vector.load %arg3[%c0_3, %c0_4] : memref<128x128xbf16, #tpu.memory_space<vmem>>, vector<128x128xbf16>
    %4 = arith.extf %3 : vector<128x128xbf16> to vector<128x128xf32>
    %cst = arith.constant dense<0.000000e+00> : vector<8x128xf32>
    %5 = tpu.matmul %0, %2, %cst {dimension_numbers = #tpu.dot_dimension_numbers<[1], [0], [0], [1], [0, 0, 1, 1], [], []>} : vector<8x32xf32>, vector<32x128xf32>, vector<8x128xf32> -> vector<8x128xf32>
    %c0_5 = arith.constant 0 : index
    %c0_6 = arith.constant 0 : index
    %6 = vector.load %arg2[%c0_5, %c0_6] : memref<1x128xf32, #tpu.memory_space<vmem>>, vector<1x128xf32>
    %7 = vector.broadcast %6 : vector<1x128xf32> to vector<8x128xf32>
    %8 = arith.addf %5, %7 : vector<8x128xf32>
    %9 = arith.negf %8 : vector<8x128xf32>
    %10 = math.exp %9 : vector<8x128xf32>
    %cst_7 = arith.constant 1.000000e+00 : f32
    %11 = vector.broadcast %cst_7 : f32 to vector<8x128xf32>
    %12 = arith.addf %11, %10 : vector<8x128xf32>
    %13 = arith.divf %11, %12 : vector<8x128xf32>
    %14 = arith.mulf %8, %13 : vector<8x128xf32>
    %cst_8 = arith.constant dense<0.000000e+00> : vector<8x128xf32>
    %15 = tpu.matmul %14, %4, %cst_8 {dimension_numbers = #tpu.dot_dimension_numbers<[1], [0], [0], [1], [0, 0, 1, 1], [], []>} : vector<8x128xf32>, vector<128x128xf32>, vector<8x128xf32> -> vector<8x128xf32>
    %c0_9 = arith.constant 0 : index
    %c0_10 = arith.constant 0 : index
    %16 = vector.load %arg4[%c0_9, %c0_10] : memref<1x128xf32, #tpu.memory_space<vmem>>, vector<1x128xf32>
    %17 = vector.broadcast %16 : vector<1x128xf32> to vector<8x128xf32>
    %18 = arith.addf %15, %17 : vector<8x128xf32>
    %c0_11 = arith.constant 0 : index
    %c0_12 = arith.constant 0 : index
    %19 = vector.load %arg5[%c0_11, %c0_12] : memref<8x128xf32, #tpu.memory_space<vmem>>, vector<8x128xf32>
    tpu.vector_store %arg5[%c0_11, %c0_12], %18 {strides = array<i32>} : memref<8x128xf32, #tpu.memory_space<vmem>>, vector<8x128xf32>,
    return
  }
}

</mosaic_0001>

<llo_original>
// kernel: tpu_custom_call.1
$region0: #{tpu_custom_call.1}
  #allocation0 [shape = 'u32[]', space=smem, size = 0x4, offset = 0x4, fixed_abs, tag = 'smem constant byte address 0x4 - core index']
  #allocation1 [shape = 'u32[144,128]{1,0:T(1,128)}', space=vmem, size = 0x12000, scoped, tag = 'internal scratch']
  %s0 = inlined_call_operand.hbm [shape: f32[8,32], index: 0, kind: input, shape index: {}]
  %s1 = inlined_call_operand.hbm [shape: bf16[32,128], index: 1, kind: input, shape index: {}]
  %s2 = inlined_call_operand.vmem [shape: f32[1,128], index: 2, kind: input, shape index: {}]
  %s3 = inlined_call_operand.hbm [shape: bf16[128,128], index: 3, kind: input, shape index: {}]
  %s4 = inlined_call_operand.vmem [shape: f32[1,128], index: 4, kind: input, shape index: {}]
  %s5 = inlined_call_operand.hbm [shape: f32[8,128], index: 5, kind: output, shape index: {}]
  %s6 = sld [smem:[#allocation0]]
  $region42: #{tpu_custom_call.1} parent=0
    _
  %s8 = ssub.s32 1, %s6
  %s9 = scalar_select 0, %s8, %s6
  $region1: #{tpu_custom_call.1} parent=0
    #allocation2 [shape = 'u8[4096]{0}', space=vmem, size = 0x1000, scoped, tag = 'input window, operand 0, single buffered']
    #allocation3 [shape = 's32[1]{0}', space=sflag, size = 0x4, scoped, tag = 'scoped memory for tpu_custom_call.1']
    #allocation4 [shape = 's32[1]{0}', space=sflag, size = 0x4, scoped, tag = 'scoped memory for tpu_custom_call.1']
    #allocation5 [shape = 'u8[8192]{0}', space=vmem, size = 0x2000, scoped, tag = 'input window, operand 1, single buffered']
    #allocation6 [shape = 's32[1]{0}', space=sflag, size = 0x4, scoped, tag = 'scoped memory for tpu_custom_call.1']
    #allocation7 [shape = 'u8[32768]{0}', space=vmem, size = 0x8000, scoped, tag = 'input window, operand 3, single buffered']
    #allocation8 [shape = 'u8[4096]{0}', space=vmem, size = 0x1000, scoped, tag = 'output window, operand 0, single buffered']
    %10 = vsyncpa [#allocation3], 0
    %11 = vsyncpa [#allocation6], 0
    %12 = vsyncpa [#allocation4], 0
    // Predicated region
    $region2: #{tpu_custom_call.1} parent=1 // pred_check
      _
    $region3: #{tpu_custom_call.1} parent=1 // pred_check_branch
      %14 = sbr.rel (0) target = $region5
    $region4: #{tpu_custom_call.1} parent=1 // pred_region
      %s16 = ssub.s32 128, 128
      %17 = vsyncadd [#allocation3], %s16
      %s19 = sshll.u32 [#allocation2], 4
      %s20 = int_to_ptr.vmem [resolvable:$true] %s19
      %22 = dma.hbm_to_vmem [thread:$0]  %s0, 128, %s20, [#allocation3]
    $region5: #{tpu_custom_call.1} parent=1 // pred_fallthru
      _
    // Predicated region
    $region6: #{tpu_custom_call.1} parent=1 // pred_check
      _
    $region7: #{tpu_custom_call.1} parent=1 // pred_check_branch
      %24 = sbr.rel (0) target = $region9
    $region8: #{tpu_custom_call.1} parent=1 // pred_region
      %s26 = ssub.s32 256, 256
      %27 = vsyncadd [#allocation6], %s26
      %s28 = sshll.u32 [#allocation5], 4
      %s29 = int_to_ptr.vmem [resolvable:$true] %s28
      %34 = dma.hbm_to_vmem [thread:$0]  %s1, 256, %s29, [#allocation6], 64, 64, 4
    $region9: #{tpu_custom_call.1} parent=1 // pred_fallthru
      _
    // Predicated region
    $region10: #{tpu_custom_call.1} parent=1 // pred_check
      _
    $region11: #{tpu_custom_call.1} parent=1 // pred_check_branch
      %36 = sbr.rel (0) target = $region13
    $region12: #{tpu_custom_call.1} parent=1 // pred_region
      _
    $region13: #{tpu_custom_call.1} parent=1 // pred_fallthru
      _
    // Predicated region
    $region14: #{tpu_custom_call.1} parent=1 // pred_check
      _
    $region15: #{tpu_custom_call.1} parent=1 // pred_check_branch
      %38 = sbr.rel (0) target = $region17
    $region16: #{tpu_custom_call.1} parent=1 // pred_region
      %s40 = ssub.s32 1024, 1024
      %41 = vsyncadd [#allocation6], %s40
      %s42 = sshll.u32 [#allocation7], 4
      %s43 = int_to_ptr.vmem [resolvable:$true] %s42
      %48 = dma.hbm_to_vmem [thread:$0]  %s3, 1024, %s43, [#allocation6], 64, 64, 4
    $region17: #{tpu_custom_call.1} parent=1 // pred_fallthru
      _
    // Predicated region
    $region18: #{tpu_custom_call.1} parent=1 // pred_check
      _
    $region19: #{tpu_custom_call.1} parent=1 // pred_check_branch
      %50 = sbr.rel (0) target = $region21
    $region20: #{tpu_custom_call.1} parent=1 // pred_region
      _
    $region21: #{tpu_custom_call.1} parent=1 // pred_fallthru
      _
    // Predicated region
    $region22: #{tpu_custom_call.1} parent=1 // pred_check
      _
    $region23: #{tpu_custom_call.1} parent=1 // pred_check_branch
      %52 = sbr.rel (0) target = $region25
    $region24: #{tpu_custom_call.1} parent=1 // pred_region
      %53 = dma.done [#allocation3], 128
    $region25: #{tpu_custom_call.1} parent=1 // pred_fallthru
      _
    // Predicated region
    $region26: #{tpu_custom_call.1} parent=1 // pred_check
      _
    $region27: #{tpu_custom_call.1} parent=1 // pred_check_branch
      %55 = sbr.rel (0) target = $region29
    $region28: #{tpu_custom_call.1} parent=1 // pred_region
      %56 = dma.done [#allocation6], 256
    $region29: #{tpu_custom_call.1} parent=1 // pred_fallthru
      _
    // Predicated region
    $region30: #{tpu_custom_call.1} parent=1 // pred_check
      _
    $region31: #{tpu_custom_call.1} parent=1 // pred_check_branch
      %58 = sbr.rel (0) target = $region33
    $region32: #{tpu_custom_call.1} parent=1 // pred_region
      %59 = dma.done [#allocation6], 1024
    $region33: #{tpu_custom_call.1} parent=1 // pred_fallthru
      _
    %v60 = vld [vmem:[#allocation2] sm:$0xff]
    %v61 = vld [vmem:[#allocation5] sm:$0xf]
    %v62 = vld [vmem:[#allocation5 + $0x4] sm:$0xf]
    %v63 = vld [vmem:[#allocation5 + $0x8] sm:$0xf]
    %v64 = vld [vmem:[#allocation5 + $0xc] sm:$0xf]
    %v65 = vunpack.c.l.bf16 %v61
    %v66 = vunpack.c.l.bf16 %v62
    %v67 = vunpack.c.l.bf16 %v63
    %v68 = vunpack.c.l.bf16 %v64
    %v69 = vld [vmem:[#allocation7] sm:$0xf]
    %v70 = vld [vmem:[#allocation7 + $0x4] sm:$0xf]
    %v71 = vld [vmem:[#allocation7 + $0x8] sm:$0xf]
    %v72 = vld [vmem:[#allocation7 + $0xc] sm:$0xf]
    %v73 = vld [vmem:[#allocation7 + $0x10] sm:$0xf]
    %v74 = vld [vmem:[#allocation7 + $0x14] sm:$0xf]
    %v75 = vld [vmem:[#allocation7 + $0x18] sm:$0xf]
    %v76 = vld [vmem:[#allocation7 + $0x1c] sm:$0xf]
    %v77 = vld [vmem:[#allocation7 + $0x20] sm:$0xf]
    %v78 = vld [vmem:[#allocation7 + $0x24] sm:$0xf]
    %v79 = vld [vmem:[#allocation7 + $0x28] sm:$0xf]
    %v80 = vld [vmem:[#allocation7 + $0x2c] sm:$0xf]
    %v81 = vld [vmem:[#allocation7 + $0x30] sm:$0xf]
    %v82 = vld [vmem:[#allocation7 + $0x34] sm:$0xf]
    %v83 = vld [vmem:[#allocation7 + $0x38] sm:$0xf]
    %v84 = vld [vmem:[#allocation7 + $0x3c] sm:$0xf]
    %v85 = vunpack.c.l.bf16 %v69
    %v86 = vunpack.c.l.bf16 %v70
    %v87 = vunpack.c.l.bf16 %v71
    %v88 = vunpack.c.l.bf16 %v72
    %v89 = vunpack.c.l.bf16 %v73
    %v90 = vunpack.c.l.bf16 %v74
    %v91 = vunpack.c.l.bf16 %v75
    %v92 = vunpack.c.l.bf16 %v76
    %v93 = vunpack.c.l.bf16 %v77
    %v94 = vunpack.c.l.bf16 %v78
    %v95 = vunpack.c.l.bf16 %v79
    %v96 = vunpack.c.l.bf16 %v80
    %v97 = vunpack.c.l.bf16 %v81
    %v98 = vunpack.c.l.bf16 %v82
    %v99 = vunpack.c.l.bf16 %v83
    %v100 = vunpack.c.l.bf16 %v84
    %v101 = vld [vmem:[%s2] sm:$0x1]
    %v103 = vlaneseq
    %v104 = vshrl.u32 %v103, 7
    %v105 = vsub.s32 0, %v104
    %v106 = vrot.slane %v101, %v105
    %vm108 = vcmask 261120
    %v110 = vsel %vm108, %v60, 0
    %112 = vmatprep.subr.mxu0 0.0
    %113 = vmatpush1.msra.mxu0 %v65
    %114 = vmatprep.subr.mxu0 0.0
    %115 = vmatpush1.msra.mxu0 %v66
    %116 = vmatprep.subr.mxu0 0.0
    %117 = vmatpush1.msra.mxu0 %v67
    %118 = vmatprep.subr.mxu0 0.0
    %119 = vmatpush1.msra.mxu0 %v68
    %120 = vmatprep.subr.mxu0 0.0
    %121 = vmatpush1.msra.mxu0 0.0
    %122 = vmatprep.subr.mxu0 0.0
    %123 = vmatpush1.msra.mxu0 0.0
    %124 = vmatprep.subr.mxu0 0.0
    %125 = vmatpush1.msra.mxu0 0.0
    %126 = vmatprep.subr.mxu0 0.0
    %127 = vmatpush1.msra.mxu0 0.0
    %128 = vmatprep.subr.mxu0 0.0
    %129 = vmatpush1.msra.mxu0 0.0
    %130 = vmatprep.subr.mxu0 0.0
    %131 = vmatpush1.msra.mxu0 0.0
    %132 = vmatprep.subr.mxu0 0.0
    %133 = vmatpush1.msra.mxu0 0.0
    %134 = vmatprep.subr.mxu0 0.0
    %135 = vmatpush1.msra.mxu0 0.0
    %136 = vmatprep.subr.mxu0 0.0
    %137 = vmatpush1.msra.mxu0 0.0
    %138 = vmatprep.subr.mxu0 0.0
    %139 = vmatpush1.msra.mxu0 0.0
    %140 = vmatprep.subr.mxu0 0.0
    %141 = vmatpush1.msra.mxu0 0.0
    %142 = vmatprep.subr.mxu0 0.0
    %143 = vmatpush1.msra.mxu0 0.0
    %144 = vmatprep.subr.mxu0 0.0
    %145 = vmatpush1.msra.mxu0 0.0
    %146 = vmatprep.subr.mxu0 0.0
    %147 = vmatpush1.msra.mxu0 0.0
    %148 = vmatprep.subr.mxu0 0.0
    %149 = vmatpush1.msra.mxu0 0.0
    %150 = vmatprep.subr.mxu0 0.0
    %151 = vmatpush1.msra.mxu0 0.0
    %152 = vmatprep.subr.mxu0 0.0
    %153 = vmatpush1.msra.mxu0 0.0
    %154 = vmatprep.subr.mxu0 0.0
    %155 = vmatpush1.msra.mxu0 0.0
    %156 = vmatprep.subr.mxu0 0.0
    %157 = vmatpush1.msra.mxu0 0.0
    %158 = vmatprep.subr.mxu0 0.0
    %159 = vmatpush1.msra.mxu0 0.0
    %160 = vmatprep.subr.mxu0 0.0
    %161 = vmatpush1.msra.mxu0 0.0
    %162 = vmatprep.subr.mxu0 0.0
    %163 = vmatpush1.msra.mxu0 0.0
    %164 = vmatprep.subr.mxu0 0.0
    %165 = vmatpush1.msra.mxu0 0.0
    %166 = vmatprep.subr.mxu0 0.0
    %167 = vmatpush1.msra.mxu0 0.0
    %168 = vmatprep.subr.mxu0 0.0
    %169 = vmatpush1.msra.mxu0 0.0
    %170 = vmatprep.subr.mxu0 0.0
    %171 = vmatpush1.msra.mxu0 0.0
    %172 = vmatprep.subr.mxu0 0.0
    %173 = vmatpush1.msra.mxu0 0.0
    %174 = vmatprep.subr.mxu0 0.0
    %175 = vmatpush1.msra.mxu0 0.0
    %176 = vmatprep.mubr.f32.mxu0 0.0
    %177 = vmatmul.mubr.f32.gmra.mrb[0].mxu0 %v110
    %v178 = vpop.f32.mrb[0].mxu0
    %v179 = vadd.f32 %v106, %v178
    %v180 = vpop.f32.mrb[0].mxu0
    %181 = vdwg.mxu0
    %v182 = vxor.u32 %v179, 2147483648
    %v183 = vmul.f32 %v182, 1.442695
    %v184 = vpow.pop %v183
    %v185 = vadd.f32 %v184, 1.0
    %v186 = vrcp.pop %v185
    %v187 = vmul.f32 1.0, %v186
    %v188 = vmul.f32 %v179, %v187
    %v189 = vld [vmem:[%s4] sm:$0x1]
    %v191 = vlaneseq
    %v192 = vshrl.u32 %v191, 7
    %v193 = vsub.s32 0, %v192
    %v194 = vrot.slane %v189, %v193
    %196 = vmatprep.subr.mxu0 0.0
    %197 = vmatpush1.msra.mxu0 %v85
    %198 = vmatprep.subr.mxu0 0.0
    %199 = vmatpush1.msra.mxu0 %v86
    %200 = vmatprep.subr.mxu0 0.0
    %201 = vmatpush1.msra.mxu0 %v87
    %202 = vmatprep.subr.mxu0 0.0
    %203 = vmatpush1.msra.mxu0 %v88
    %204 = vmatprep.subr.mxu0 0.0
    %205 = vmatpush1.msra.mxu0 %v89
    %206 = vmatprep.subr.mxu0 0.0
    %207 = vmatpush1.msra.mxu0 %v90
    %208 = vmatprep.subr.mxu0 0.0
    %209 = vmatpush1.msra.mxu0 %v91
    %210 = vmatprep.subr.mxu0 0.0
    %211 = vmatpush1.msra.mxu0 %v92
    %212 = vmatprep.subr.mxu0 0.0
    %213 = vmatpush1.msra.mxu0 %v93
    %214 = vmatprep.subr.mxu0 0.0
    %215 = vmatpush1.msra.mxu0 %v94
    %216 = vmatprep.subr.mxu0 0.0
    %217 = vmatpush1.msra.mxu0 %v95
    %218 = vmatprep.subr.mxu0 0.0
    %219 = vmatpush1.msra.mxu0 %v96
    %220 = vmatprep.subr.mxu0 0.0
    %221 = vmatpush1.msra.mxu0 %v97
    %222 = vmatprep.subr.mxu0 0.0
    %223 = vmatpush1.msra.mxu0 %v98
    %224 = vmatprep.subr.mxu0 0.0
    %225 = vmatpush1.msra.mxu0 %v99
    %226 = vmatprep.subr.mxu0 0.0
    %227 = vmatpush1.msra.mxu0 %v100
    %228 = vmatprep.subr.mxu0 0.0
    %229 = vmatpush1.msra.mxu0 0.0
    %230 = vmatprep.subr.mxu0 0.0
    %231 = vmatpush1.msra.mxu0 0.0
    %232 = vmatprep.subr.mxu0 0.0
    %233 = vmatpush1.msra.mxu0 0.0
    %234 = vmatprep.subr.mxu0 0.0
    %235 = vmatpush1.msra.mxu0 0.0
    %236 = vmatprep.subr.mxu0 0.0
    %237 = vmatpush1.msra.mxu0 0.0
    %238 = vmatprep.subr.mxu0 0.0
    %239 = vmatpush1.msra.mxu0 0.0
    %240 = vmatprep.subr.mxu0 0.0
    %241 = vmatpush1.msra.mxu0 0.0
    %242 = vmatprep.subr.mxu0 0.0
    %243 = vmatpush1.msra.mxu0 0.0
    %244 = vmatprep.subr.mxu0 0.0
    %245 = vmatpush1.msra.mxu0 0.0
    %246 = vmatprep.subr.mxu0 0.0
    %247 = vmatpush1.msra.mxu0 0.0
    %248 = vmatprep.subr.mxu0 0.0
    %249 = vmatpush1.msra.mxu0 0.0
    %250 = vmatprep.subr.mxu0 0.0
    %251 = vmatpush1.msra.mxu0 0.0
    %252 = vmatprep.subr.mxu0 0.0
    %253 = vmatpush1.msra.mxu0 0.0
    %254 = vmatprep.subr.mxu0 0.0
    %255 = vmatpush1.msra.mxu0 0.0
    %256 = vmatprep.subr.mxu0 0.0
    %257 = vmatpush1.msra.mxu0 0.0
    %258 = vmatprep.subr.mxu0 0.0
    %259 = vmatpush1.msra.mxu0 0.0
    %260 = vmatprep.mubr.f32.mxu0 0.0
    %261 = vmatmul.mubr.f32.gmra.mrb[0].mxu0 %v188
    %v262 = vpop.f32.mrb[0].mxu0
    %v263 = vadd.f32 %v194, %v262
    %v264 = vpop.f32.mrb[0].mxu0
    %265 = vdwg.mxu0
    %266 = vst [vmem:[#allocation8] sm:$0xff] %v263
    // Predicated region
    $region34: #{tpu_custom_call.1} parent=1 // pred_check
      _
    $region35: #{tpu_custom_call.1} parent=1 // pred_check_branch
      %268 = sbr.rel (0) target = $region37
    $region36: #{tpu_custom_call.1} parent=1 // pred_region
      %s270 = ssub.s32 128, 128
      %271 = vsyncadd [#allocation4], %s270
      %s273 = sshll.u32 [#allocation8], 4
      %s274 = int_to_ptr.vmem [resolvable:$true] %s273
      %276 = dma.vmem_to_hbm [thread:$0]  %s274, 128, %s5, [#allocation4]
    $region37: #{tpu_custom_call.1} parent=1 // pred_fallthru
      _
    // Predicated region
    $region38: #{tpu_custom_call.1} parent=1 // pred_check
      _
    $region39: #{tpu_custom_call.1} parent=1 // pred_check_branch
      %278 = sbr.rel (0) target = $region41
    $region40: #{tpu_custom_call.1} parent=1 // pred_region
      %279 = dma.done [#allocation4], 128
    $region41: #{tpu_custom_call.1} parent=1 // pred_fallthru
      _
    %280 = vsyncpa [#allocation3], 1
    %281 = vsyncpa [#allocation6], 1
    %282 = vsyncpa [#allocation4], 1

</llo_original>
